<compile_context>
chip_gen: v6e
topology: v6e:2x2x1
jax: 0.10.0
libtpu: 0.0.40
codegen_flags: <defaults>
</compile_context>

<pallas_src>
import functools

import jax
import jax.numpy as jnp
from jax.experimental import pallas as pl
from jax.experimental.pallas import tpu as pltpu


# --------------------------------- kernels -----------------------------------


def _glu_split_kernel(out_ref, gate_ref, o_ref):
    """Halves arrive as separate, identically shaped blocks (DMA did the split)."""
    out = out_ref[...].astype(jnp.float32)
    gate = gate_ref[...].astype(jnp.float32)
    o_ref[...] = (out * jax.nn.sigmoid(gate)).astype(o_ref.dtype)


def _glu_fused_kernel(x_ref, o_ref, *, axis):
    """Fallback: block carries the full (2*C) split axis; slice inside the kernel."""
    c = o_ref.shape[axis]
    x = x_ref[...]
    out = jax.lax.slice_in_dim(x, 0, c, axis=axis).astype(jnp.float32)
    gate = jax.lax.slice_in_dim(x, c, 2 * c, axis=axis).astype(jnp.float32)
    o_ref[...] = (out * jax.nn.sigmoid(gate)).astype(o_ref.dtype)


# --------------------------- hardware-aware sizing ----------------------------


def _round_up(n, m):
    return ((n + m - 1) // m) * m


def _sublane_multiple(dtype):
    """Sublane packing multiple: 8 for f32, 16 for bf16, 32 for int8/fp8."""
    return max(8, 32 // jnp.dtype(dtype).itemsize)


def _tpu_vmem_capacity():
    """Physical VMEM bytes (per TensorCore); conservative fallback if unknown."""
    try:
        cap = int(getattr(pltpu.get_tpu_info(), "vmem_capacity_bytes", 0))
        if cap > 0:
            return cap
    except Exception:
        pass
    return 64 * 1024 * 1024  # v7x per-TC figure — safe lower bound everywhere


def _num_tensorcores():
    """TensorCores per chip visible to one program (megacore sharding targets)."""
    try:
        kind = jax.devices()[0].device_kind.lower()
        if "v7" in kind:
            return 2
    except Exception:
        pass
    return 1


def _vmem_budget():
    """(scoped vmem_limit_bytes, per-block byte budget)."""
    vmem = _tpu_vmem_capacity()
    # ~75% of physical VMEM as the scoped limit (headroom for compiler scratch),
    # never below the 32 MiB this kernel was already using.
    limit = max(32 * 1024 * 1024, min(vmem * 3 // 4, 96 * 1024 * 1024))
    # Split-path footprint = (2 in + 1 out) x double buffering = 6 blocks; keep
    # 40% slack inside the scoped limit.  Cap single blocks at ~8 MiB.
    block = min((limit * 3 // 5) // 6, 8 * 1024 * 1024)
    return limit, block


def _compiler_params(n_axes, limit):
    return pltpu.CompilerParams(
        dimension_semantics=("parallel",) * n_axes,
        vmem_limit_bytes=limit,
    )


def _cost_estimate(in_bytes, out_elems, out_bytes):
    # read all of x, write the half-sized output; 1 transcendental + ~2 flops/elem.
    return pl.CostEstimate(
        flops=2 * int(out_elems),
        transcendentals=int(out_elems),
        bytes_accessed=int(in_bytes + out_bytes),
    )


def _divisors_desc(n, mult):
    """Divisors of n that are multiples of `mult`, largest first (n % mult == 0)."""
    return [d for d in range(n, mult - 1, -mult) if n % d == 0]


def _row_tile(m, row_bytes, budget, sub):
    """Largest row tile (multiple of `sub`) with tile*row_bytes <= budget."""
    tm = max(sub, (budget // max(row_bytes, 1)) // sub * sub)
    return min(tm, _round_up(m, sub))


def _ensure_parallel_blocks(tm, m, sub, n_tc, other_blocks=1):
    """Shrink tm so the grid has >= n_tc blocks (keeps both v7x TCs busy)."""
    if n_tc <= 1 or other_blocks * pl.cdiv(m, tm) >= n_tc:
        return tm
    target = max(sub, _round_up(pl.cdiv(m, n_tc), sub))
    return target if target < tm else tm


# ------------------------------ pallas wrappers -------------------------------


def _glu_last_axis(x):
    """GLU over the last axis of a 2-D (M, 2H) array -> (M, H)."""
    m, two_h = x.shape
    h = two_h // 2
    itemsize = x.dtype.itemsize
    sub = _sublane_multiple(x.dtype)
    limit, budget = _vmem_budget()
    n_tc = _num_tensorcores()
    out_elems = m * h
    cost = _cost_estimate(x.size * itemsize, out_elems, out_elems * itemsize)

    # Lane tile: must divide H exactly (gate half starts on a block boundary)
    # and be a multiple of 128 (lane-dense, unmasked stores). Prefer the widest
    # divisor that still leaves room for >= `sub` rows within the block budget.
    th = None
    if h % 128 == 0:
        max_th = max(128, (budget // (sub * itemsize)) // 128 * 128)
        for d in _divisors_desc(h, 128):
            if d <= max_th:
                th = d
                break

    if th is None:
        # H not lane-aligned: fused fallback — full 2H last dim, tiled over rows.
        # tm sized against the OUTPUT row bytes (the 2H input block only yields
        # H output), so the useful work per step matches the split path.
        tm = _row_tile(m, h * itemsize, budget, sub)
        tm = _ensure_parallel_blocks(tm, m, sub, n_tc)
        return pl.pallas_call(
            functools.partial(_glu_fused_kernel, axis=1),
            out_shape=jax.ShapeDtypeStruct((m, h), x.dtype),
            grid=(pl.cdiv(m, tm),),
            in_specs=[pl.BlockSpec((tm, two_h), lambda i: (i, 0))],
            out_specs=pl.BlockSpec((tm, h), lambda i: (i, 0)),
            compiler_params=_compiler_params(1, limit),
            cost_estimate=cost,
        )(x)

    tm = _row_tile(m, th * itemsize, budget, sub)
    h_blocks = h // th
    tm = _ensure_parallel_blocks(tm, m, sub, n_tc, other_blocks=h_blocks)
    return pl.pallas_call(
        _glu_split_kernel,
        out_shape=jax.ShapeDtypeStruct((m, h), x.dtype),
        grid=(pl.cdiv(m, tm), h_blocks),
        in_specs=[
            pl.BlockSpec((tm, th), lambda i, j: (i, j)),                      # out
            pl.BlockSpec((tm, th), lambda i, j, hb=h_blocks: (i, j + hb)),    # gate
        ],
        out_specs=pl.BlockSpec((tm, th), lambda i, j: (i, j)),
        compiler_params=_compiler_params(2, limit),
        cost_estimate=cost,
    )(x, x)


def _glu_mid_axis(x):
    """GLU over the middle axis of a 3-D (L, 2C, R) array -> (L, C, R)."""
    l, two_c, r = x.shape
    c = two_c // 2
    itemsize = x.dtype.itemsize
    sub = _sublane_multiple(x.dtype)
    limit, budget = _vmem_budget()
    n_tc = _num_tensorcores()
    out_elems = l * c * r
    cost = _cost_estimate(x.size * itemsize, out_elems, out_elems * itemsize)
    row_bytes = r * itemsize  # bytes of one channel row

    if c % sub != 0:
        # C not sublane-packable: fused fallback, full 2C axis per block.
        # (Perf hazard on v5e — keep channel counts sublane-aligned upstream.)
        if two_c * row_bytes <= budget:
            tl = max(1, min(l, budget // max(c * row_bytes, 1)))
            if n_tc > 1 and l > 1 and pl.cdiv(l, tl) < n_tc:
                tl = max(1, pl.cdiv(l, n_tc))
            return pl.pallas_call(
                functools.partial(_glu_fused_kernel, axis=1),
                out_shape=jax.ShapeDtypeStruct((l, c, r), x.dtype),
                grid=(pl.cdiv(l, tl),),
                in_specs=[pl.BlockSpec((tl, two_c, r), lambda i: (i, 0, 0))],
                out_specs=pl.BlockSpec((tl, c, r), lambda i: (i, 0, 0)),
                compiler_params=_compiler_params(1, limit),
                cost_estimate=cost,
            )(x)
        # Very large unaligned channel axis: additionally tile the lane axis.
        tr = max(128, (budget // max(two_c * itemsize, 1)) // 128 * 128)
        if tr >= r:
            tr = r
        return pl.pallas_call(
            functools.partial(_glu_fused_kernel, axis=1),
            out_shape=jax.ShapeDtypeStruct((l, c, r), x.dtype),
            grid=(l, pl.cdiv(r, tr)),
            in_specs=[pl.BlockSpec((1, two_c, tr), lambda i, k: (i, 0, k))],
            out_specs=pl.BlockSpec((1, c, tr), lambda i, k: (i, 0, k)),
            compiler_params=_compiler_params(2, limit),
            cost_estimate=cost,
        )(x)

    # ---- split-at-BlockSpec fast path (C is sublane-aligned) ----
    if c * row_bytes <= budget:
        # Full (C, R) slab per block; batch several L elements per step.
        # NOTE: if R < 128 the output stores are lane-masked — callers that can
        # choose should prefer channel-last layout (dim=-1) for such shapes.
        tl = max(1, min(l, budget // max(c * row_bytes, 1)))
        if n_tc > 1 and l > 1 and pl.cdiv(l, tl) < n_tc:
            tl = max(1, pl.cdiv(l, n_tc))
        return pl.pallas_call(
            _glu_split_kernel,
            out_shape=jax.ShapeDtypeStruct((l, c, r), x.dtype),
            grid=(pl.cdiv(l, tl),),
            in_specs=[
                pl.BlockSpec((tl, c, r), lambda i: (i, 0, 0)),   # out half
                pl.BlockSpec((tl, c, r), lambda i: (i, 1, 0)),   # gate half
            ],
            out_specs=pl.BlockSpec((tl, c, r), lambda i: (i, 0, 0)),
            compiler_params=_compiler_params(1, limit),
            cost_estimate=cost,
        )(x, x)

    # Tile the half-channel axis; keep the full (contiguous) lane axis.
    tc = None
    for d in _divisors_desc(c, sub):
        if d * row_bytes <= budget:
            tc = d
            break
    if tc is not None:
        c_blocks = c // tc
        return pl.pallas_call(
            _glu_split_kernel,
            out_shape=jax.ShapeDtypeStruct((l, c, r), x.dtype),
            grid=(l, c_blocks),
            in_specs=[
                pl.BlockSpec((1, tc, r), lambda i, j: (i, j, 0)),
                pl.BlockSpec((1, tc, r), lambda i, j, cb=c_blocks: (i, j + cb, 0)),
            ],
            out_specs=pl.BlockSpec((1, tc, r), lambda i, j: (i, j, 0)),
            compiler_params=_compiler_params(2, limit),
            cost_estimate=cost,
        )(x, x)

    # Even `sub` channels at full R exceed the budget: tile the lane axis too.
    tc = sub
    c_blocks = c // tc
    tr = max(128, (budget // max(tc * itemsize, 1)) // 128 * 128)
    if tr >= r:
        tr = r
    return pl.pallas_call(
        _glu_split_kernel,
        out_shape=jax.ShapeDtypeStruct((l, c, r), x.dtype),
        grid=(l, c_blocks, pl.cdiv(r, tr)),
        in_specs=[
            pl.BlockSpec((1, tc, tr), lambda i, j, k: (i, j, k)),
            pl.BlockSpec((1, tc, tr), lambda i, j, k, cb=c_blocks: (i, j + cb, k)),
        ],
        out_specs=pl.BlockSpec((1, tc, tr), lambda i, j, k: (i, j, k)),
        compiler_params=_compiler_params(3, limit),
        cost_estimate=cost,
    )(x, x)


def glu(x: jax.Array, dim: int = -1) -> jax.Array:
    """Gated Linear Unit: split `x` in two along `dim`, return out * sigmoid(gate)."""
    ndim = x.ndim
    dim = dim % ndim
    two_c = x.shape[dim]
    assert two_c % 2 == 0, "GLU split dimension must be even"
    c = two_c // 2
    out_shape = x.shape[:dim] + (c,) + x.shape[dim + 1:]

    if dim == ndim - 1:
        y = _glu_last_axis(x.reshape(-1, two_c))
        return y.reshape(out_shape)

    # Non-last split axis: canonical (L, 2C, R) view; the split happens on the
    # sublane (or leading) axis purely via the BlockSpec index_map — no transpose.
    l = 1
    for s in x.shape[:dim]:
        l *= s
    r = 1
    for s in x.shape[dim + 1:]:
        r *= s
    y = _glu_mid_axis(x.reshape(l, two_c, r))
    return y.reshape(out_shape)


# ----------------------------------- demo -------------------------------------


if __name__ == "__main__":
    def _ref(x, dim=-1):
        out, gate = jnp.split(x, 2, axis=dim)
        return out * jax.nn.sigmoid(gate)

    # 1) last-axis GLU, lane-aligned H (optimized split-at-BlockSpec path).
    x = jax.random.normal(jax.random.PRNGKey(0), (2, 8, 256), dtype=jnp.float32)
    y = glu(x, dim=-1)
    jax.block_until_ready(y)
    assert y.shape == (2, 8, 128)
    assert jnp.allclose(y, _ref(x, -1), atol=1e-5, rtol=1e-5)

    # 2) bf16 I/O (f32 math inside the kernel, cast on store).
    xb = x.astype(jnp.bfloat16)
    yb = glu(xb, dim=-1)
    jax.block_until_ready(yb)
    assert yb.dtype == jnp.bfloat16
    assert jnp.allclose(yb.astype(jnp.float32),
                        _ref(xb.astype(jnp.float32), -1),
                        atol=2e-2, rtol=2e-2)

    # 3) last-axis GLU with H not a multiple of 128 (fused fallback path).
    x2 = jax.random.normal(jax.random.PRNGKey(1), (2, 8, 128), dtype=jnp.float32)
    y2 = glu(x2, dim=-1)
    jax.block_until_ready(y2)
    assert y2.shape == (2, 8, 64)
    assert jnp.allclose(y2, _ref(x2, -1), atol=1e-5, rtol=1e-5)

    # 4) channel-dim GLU (torch dim=1, e.g. (B, 2C, N) after a Conv1d) —
    #    split on the sublane axis via BlockSpecs, no transpose.
    x3 = jax.random.normal(jax.random.PRNGKey(2), (2, 256, 256), dtype=jnp.float32)
    y3 = glu(x3, dim=1)
    jax.block_until_ready(y3)
    assert y3.shape == (2, 128, 256)
    assert jnp.allclose(y3, _ref(x3, 1), atol=1e-5, rtol=1e-5)

    # 5) channel-dim GLU with a tiny, unaligned channel count (fused fallback).
    x4 = jax.random.normal(jax.random.PRNGKey(3), (2, 8, 16), dtype=jnp.float32)
    y4 = glu(x4, dim=1)
    jax.block_until_ready(y4)
    assert y4.shape == (2, 4, 16)
    assert jnp.allclose(y4, _ref(x4, 1), atol=1e-5, rtol=1e-5)

    print("KERNEL_OK")
</pallas_src>

<mosaic_0001>
module attributes {stable_mosaic.version = 11 : i64} {
  func.func @_glu_split_kernel(%arg0: i32, %arg1: i32, %arg2: memref<16x128xf32, #tpu.memory_space<vmem>>, %arg3: memref<16x128xf32, #tpu.memory_space<vmem>>, %arg4: memref<16x128xf32, #tpu.memory_space<vmem>>) attributes {dimension_semantics = [#tpu.dimension_semantics<parallel>, #tpu.dimension_semantics<parallel>], iteration_bounds = array<i64: 1, 1>, scalar_prefetch = 0 : i64, scratch_operands = 0 : i64, tpu.core_type = #tpu.core_type<tc>, window_params = [{transform_indices = @transform_0, window_bounds = array<i64: 16, 128>}, {transform_indices = @transform_1, window_bounds = array<i64: 16, 128>}, {transform_indices = @transform_2, window_bounds = array<i64: 16, 128>}]} {
    %c0 = arith.constant 0 : index
    %c0_0 = arith.constant 0 : index
    %0 = vector.load %arg2[%c0, %c0_0] : memref<16x128xf32, #tpu.memory_space<vmem>>, vector<16x128xf32>
    %c0_1 = arith.constant 0 : index
    %c0_2 = arith.constant 0 : index
    %1 = vector.load %arg3[%c0_1, %c0_2] : memref<16x128xf32, #tpu.memory_space<vmem>>, vector<16x128xf32>
    %2 = arith.negf %1 : vector<16x128xf32>
    %3 = math.exp %2 : vector<16x128xf32>
    %cst = arith.constant 1.000000e+00 : f32
    %4 = vector.broadcast %cst : f32 to vector<16x128xf32>
    %5 = arith.addf %4, %3 : vector<16x128xf32>
    %6 = arith.divf %4, %5 : vector<16x128xf32>
    %7 = arith.mulf %0, %6 : vector<16x128xf32>
    %c0_3 = arith.constant 0 : index
    %c0_4 = arith.constant 0 : index
    %8 = vector.load %arg4[%c0_3, %c0_4] : memref<16x128xf32, #tpu.memory_space<vmem>>, vector<16x128xf32>
    tpu.vector_store %arg4[%c0_3, %c0_4], %7 {strides = array<i32>} : memref<16x128xf32, #tpu.memory_space<vmem>>, vector<16x128xf32>,
    return
  }
  func.func @transform_0(%arg0: i32, %arg1: i32) -> (i32, i32) {
    %c0_i32 = arith.constant 0 : i32
    return %arg0, %arg1 : i32, i32
  }
  func.func @transform_1(%arg0: i32, %arg1: i32) -> (i32, i32) {
    %c1_i32 = arith.constant 1 : i32
    %0 = arith.addi %arg1, %c1_i32 : i32
    %c0_i32 = arith.constant 0 : i32
    return %arg0, %0 : i32, i32
  }
  func.func @transform_2(%arg0: i32, %arg1: i32) -> (i32, i32) {
    %c0_i32 = arith.constant 0 : i32
    return %arg0, %arg1 : i32, i32
  }
}

</mosaic_0001>

<llo_original>
// kernel: tpu_custom_call.1
$region0: #{tpu_custom_call.1}
  #allocation0 [shape = 'u32[]', space=smem, size = 0x4, offset = 0x4, fixed_abs, tag = 'smem constant byte address 0x4 - core index']
  #allocation1 [shape = 'u32[144,128]{1,0:T(1,128)}', space=vmem, size = 0x12000, scoped, tag = 'internal scratch']
  %s0 = inlined_call_operand.hbm [shape: f32[16,256], index: 0, kind: input, shape index: {}]
  %s1 = inlined_call_operand.hbm [shape: f32[16,256], index: 1, kind: input, shape index: {}]
  %s2 = inlined_call_operand.hbm [shape: f32[16,128], index: 2, kind: output, shape index: {}]
  %s3 = sld [smem:[#allocation0]]
  $region26: #{tpu_custom_call.1} parent=0
    _
  %s5 = ssub.s32 1, %s3
  %s6 = scalar_select 0, %s5, %s3
  $region1: #{tpu_custom_call.1} parent=0
    #allocation2 [shape = 'u8[8192]{0}', space=vmem, size = 0x2000, scoped, tag = 'input window, operand 0, single buffered']
    #allocation3 [shape = 's32[1]{0}', space=sflag, size = 0x4, scoped, tag = 'scoped memory for tpu_custom_call.1']
    #allocation4 [shape = 's32[1]{0}', space=sflag, size = 0x4, scoped, tag = 'scoped memory for tpu_custom_call.1']
    #allocation5 [shape = 'u8[8192]{0}', space=vmem, size = 0x2000, scoped, tag = 'input window, operand 1, single buffered']
    #allocation6 [shape = 's32[1]{0}', space=sflag, size = 0x4, scoped, tag = 'scoped memory for tpu_custom_call.1']
    #allocation7 [shape = 'u8[8192]{0}', space=vmem, size = 0x2000, scoped, tag = 'output window, operand 0, single buffered']
    %7 = vsyncpa [#allocation3], 0
    %8 = vsyncpa [#allocation6], 0
    %9 = vsyncpa [#allocation4], 0
    // Predicated region
    $region2: #{tpu_custom_call.1} parent=1 // pred_check
      _
    $region3: #{tpu_custom_call.1} parent=1 // pred_check_branch
      %11 = sbr.rel (0) target = $region5
    $region4: #{tpu_custom_call.1} parent=1 // pred_region
      %s13 = ssub.s32 256, 256
      %14 = vsyncadd [#allocation3], %s13
      %s15 = sshll.u32 [#allocation2], 4
      %s16 = int_to_ptr.vmem [resolvable:$true] %s15
      %21 = dma.hbm_to_vmem [thread:$0]  %s0, 256, %s16, [#allocation3], 256, 128, 8
    $region5: #{tpu_custom_call.1} parent=1 // pred_fallthru
      _
    // Predicated region
    $region6: #{tpu_custom_call.1} parent=1 // pred_check
      _
    $region7: #{tpu_custom_call.1} parent=1 // pred_check_branch
      %23 = sbr.rel (0) target = $region9
    $region8: #{tpu_custom_call.1} parent=1 // pred_region
      %s24 = sadd.s32 0, 1
      %s26 = ssub.s32 256, 256
      %27 = vsyncadd [#allocation6], %s26
      %s28 = smul.addr %s24, 128
      %s29 = scalar_lea.hbm %s1, %s28
      %s30 = sshll.u32 [#allocation5], 4
      %s31 = int_to_ptr.vmem [resolvable:$true] %s30
      %36 = dma.hbm_to_vmem [thread:$0]  %s29, 256, %s31, [#allocation6], 256, 128, 8
    $region9: #{tpu_custom_call.1} parent=1 // pred_fallthru
      _
    // Predicated region
    $region10: #{tpu_custom_call.1} parent=1 // pred_check
      _
    $region11: #{tpu_custom_call.1} parent=1 // pred_check_branch
      %38 = sbr.rel (0) target = $region13
    $region12: #{tpu_custom_call.1} parent=1 // pred_region
      %39 = dma.done [#allocation3], 256
    $region13: #{tpu_custom_call.1} parent=1 // pred_fallthru
      _
    // Predicated region
    $region14: #{tpu_custom_call.1} parent=1 // pred_check
      _
    $region15: #{tpu_custom_call.1} parent=1 // pred_check_branch
      %41 = sbr.rel (0) target = $region17
    $region16: #{tpu_custom_call.1} parent=1 // pred_region
      %42 = dma.done [#allocation6], 256
    $region17: #{tpu_custom_call.1} parent=1 // pred_fallthru
      _
    %s43 = sadd.s32 0, 1
    %v44 = vld [vmem:[#allocation2] sm:$0xff]
    %v45 = vld [vmem:[#allocation2 + $0x8] sm:$0xff]
    %v46 = vld [vmem:[#allocation5] sm:$0xff]
    %v47 = vld [vmem:[#allocation5 + $0x8] sm:$0xff]
    %v48 = vxor.u32 %v46, 2147483648
    %v49 = vxor.u32 %v47, 2147483648
    %v50 = vmul.f32 %v48, 1.442695
    %v51 = vpow.pop %v50
    %v52 = vmul.f32 %v49, 1.442695
    %v53 = vpow.pop %v52
    %v54 = vadd.f32 %v51, 1.0
    %v55 = vadd.f32 %v53, 1.0
    %v56 = vrcp.pop %v54
    %v57 = vmul.f32 1.0, %v56
    %v58 = vrcp.pop %v55
    %v59 = vmul.f32 1.0, %v58
    %v60 = vmul.f32 %v44, %v57
    %v61 = vmul.f32 %v45, %v59
    %62 = vst [vmem:[#allocation7] sm:$0xff] %v60
    %63 = vst [vmem:[#allocation7 + $0x8] sm:$0xff] %v61
    // Predicated region
    $region18: #{tpu_custom_call.1} parent=1 // pred_check
      _
    $region19: #{tpu_custom_call.1} parent=1 // pred_check_branch
      %65 = sbr.rel (0) target = $region21
    $region20: #{tpu_custom_call.1} parent=1 // pred_region
      %s67 = ssub.s32 256, 256
      %68 = vsyncadd [#allocation4], %s67
      %s69 = sshll.u32 [#allocation7], 4
      %s70 = int_to_ptr.vmem [resolvable:$true] %s69
      %75 = dma.vmem_to_hbm [thread:$0]  %s70, 256, %s2, [#allocation4], 128, 128, 8
    $region21: #{tpu_custom_call.1} parent=1 // pred_fallthru
      _
    // Predicated region
    $region22: #{tpu_custom_call.1} parent=1 // pred_check
      _
    $region23: #{tpu_custom_call.1} parent=1 // pred_check_branch
      %77 = sbr.rel (0) target = $region25
    $region24: #{tpu_custom_call.1} parent=1 // pred_region
      %78 = dma.done [#allocation4], 256
    $region25: #{tpu_custom_call.1} parent=1 // pred_fallthru
      _
    %79 = vsyncpa [#allocation3], 1
    %80 = vsyncpa [#allocation6], 1
    %81 = vsyncpa [#allocation4], 1

</llo_original>
